<compile_context>
chip_gen: v5e
topology: v5e:2x2
jax: 0.10.0
libtpu: 0.0.40
codegen_flags: <defaults>
</compile_context>

<pallas_src>
import math
import functools

import jax
import jax.numpy as jnp
from jax import lax
from jax.experimental import pallas as pl
from jax.experimental.pallas import tpu as pltpu


_INV_SQRT2 = 1.0 / math.sqrt(2.0)


def _gelu_exact(x):
    # PyTorch nn.GELU() default: exact erf-based GELU.
    return 0.5 * x * (1.0 + lax.erf(x * _INV_SQRT2))


def _head_kernel(x_ref, w1_ref, b1_ref, w2_ref, b2_ref, w3_ref, b3_ref, o_ref):
    cdt = w1_ref.dtype  # MXU operand dtype (matches the activation dtype)

    # Linear 1 + GELU (dropout = identity at inference).
    h = jnp.dot(x_ref[...], w1_ref[...], preferred_element_type=jnp.float32)
    h = _gelu_exact(h + b1_ref[...])

    # Linear 2 + GELU.
    h = jnp.dot(h.astype(cdt), w2_ref[...], preferred_element_type=jnp.float32)
    h = _gelu_exact(h + b2_ref[...])

    # Linear 3 (logits), f32 output.
    out = jnp.dot(h.astype(cdt), w3_ref[...], preferred_element_type=jnp.float32)
    o_ref[...] = (out + b3_ref[...]).astype(o_ref.dtype)


def _round_up(n, m):
    return ((n + m - 1) // m) * m


@functools.partial(jax.jit, static_argnames=("tile_b",))
def classification_head(x, w1, b1, w2, b2, w3, b3, *, tile_b=2048):
    """x: (B, hidden_dim, d_model) or any (B, ...) -> f32 logits (B, n_cls)."""
    assert tile_b % 8 == 0, "tile_b must be a multiple of 8"

    B = x.shape[0]
    x2d = x.reshape(B, -1)
    in_dim = x2d.shape[1]
    mlp_hidden = w1.shape[1]
    hid = w2.shape[1]
    n_cls = w3.shape[1]

    # Cast weights once to the activation dtype (bf16 stays bf16 on the MXU);
    # biases stay f32 and are added to the f32 accumulator in-kernel.
    cdt = x2d.dtype
    w1 = w1.astype(cdt)
    w2 = w2.astype(cdt)
    w3 = w3.astype(cdt)
    b1 = b1.reshape(1, mlp_hidden).astype(jnp.float32)
    b2 = b2.reshape(1, hid).astype(jnp.float32)
    b3 = b3.reshape(1, n_cls).astype(jnp.float32)

    # Batch tiling with ragged last block (no padding, no output slice):
    #  - tiny batches: one block equal to the full array (always layout-legal)
    #  - moderate batches: split into >=2 steps so megacore can share the grid
    #  - large batches: fixed tile_b rows per step, auto double-buffered.
    if B <= 256:
        tb = B
    elif B <= tile_b:
        tb = _round_up(pl.cdiv(B, 2), 8)
    else:
        tb = tile_b
    grid = (pl.cdiv(B, tb),)

    act_bytes = jnp.dtype(cdt).itemsize
    weight_bytes = sum(
        a.size * jnp.dtype(a.dtype).itemsize for a in (w1, b1, w2, b2, w3, b3)
    )

    # Double-buffered activation + output tiles + resident weights + headroom.
    vmem_est = (2 * tb * in_dim * act_bytes
                + 2 * tb * n_cls * 4
                + weight_bytes
                + (2 << 20))
    cp_kwargs = dict(dimension_semantics=("parallel",))
    if vmem_est > (16 << 20):  # only override when beyond v5e's default limit
        cp_kwargs["vmem_limit_bytes"] = int(min(vmem_est, 64 << 20))

    cost = pl.CostEstimate(
        flops=2 * B * (in_dim * mlp_hidden + mlp_hidden * hid + hid * n_cls),
        transcendentals=B * (mlp_hidden + hid),
        bytes_accessed=B * in_dim * act_bytes + weight_bytes + B * n_cls * 4,
    )

    resident = lambda shape: pl.BlockSpec(shape, lambda i: (0, 0))

    return pl.pallas_call(
        _head_kernel,
        out_shape=jax.ShapeDtypeStruct((B, n_cls), jnp.float32),
        grid=grid,
        in_specs=[
            pl.BlockSpec((tb, in_dim), lambda i: (i, 0)),   # streamed activations
            resident((in_dim, mlp_hidden)),                 # resident weights
            resident((1, mlp_hidden)),
            resident((mlp_hidden, hid)),
            resident((1, hid)),
            resident((hid, n_cls)),
            resident((1, n_cls)),
        ],
        out_specs=pl.BlockSpec((tb, n_cls), lambda i: (i, 0)),
        compiler_params=pltpu.CompilerParams(**cp_kwargs),
        cost_estimate=cost,
    )(x2d, w1, b1, w2, b2, w3, b3)


def _reference(x, w1, b1, w2, b2, w3, b3):
    x2d = x.reshape(x.shape[0], -1).astype(jnp.float32)
    h = _gelu_exact(x2d @ w1 + b1.reshape(1, -1))
    h = _gelu_exact(h @ w2 + b2.reshape(1, -1))
    return h @ w3 + b3.reshape(1, -1)


if __name__ == "__main__":
    # Shapes consistent with the module:
    #   d_model = 32, hidden_dim = 8  -> flattened input dim = 256
    #   mlp_hidden_size = 64, num classes = 4, batch = 2
    d_model, hidden_dim, mlp_hidden_size = 32, 8, 64
    in_dim = d_model * hidden_dim

    key = jax.random.PRNGKey(0)
    kx, k1, k2, k3, k4, k5, k6 = jax.random.split(key, 7)

    # Deterministic parameter init (kaiming-uniform-ish scales), stored (in, out).
    def init_linear(kw, kb, fan_in, fan_out):
        bound = 1.0 / math.sqrt(fan_in)
        w = jax.random.uniform(kw, (fan_in, fan_out), jnp.float32, -bound, bound)
        b = jax.random.uniform(kb, (1, fan_out), jnp.float32, -bound, bound)
        return w, b

    w1, b1 = init_linear(k1, k2, in_dim, mlp_hidden_size)
    w2, b2 = init_linear(k3, k4, mlp_hidden_size, hidden_dim)
    w3, b3 = init_linear(k5, k6, hidden_dim, 4)

    # Case 1: tiny batch (single full-extent block path).
    B = 2
    x = jax.random.normal(kx, (B, hidden_dim, d_model), dtype=jnp.float32)
    out = jax.block_until_ready(classification_head(x, w1, b1, w2, b2, w3, b3))
    ref = _reference(x, w1, b1, w2, b2, w3, b3)
    assert out.shape == (B, 4), out.shape
    assert jnp.allclose(out, ref, atol=1e-4, rtol=1e-4), (
        f"max abs err {jnp.max(jnp.abs(out - ref))}"
    )

    # Case 2: moderate ragged batch (two-step grid, ragged last block, no pad).
    B2 = 600
    x2 = jax.random.normal(kx, (B2, hidden_dim, d_model), dtype=jnp.float32)
    out2 = jax.block_until_ready(classification_head(x2, w1, b1, w2, b2, w3, b3))
    ref2 = _reference(x2, w1, b1, w2, b2, w3, b3)
    assert out2.shape == (B2, 4), out2.shape
    assert jnp.allclose(out2, ref2, atol=1e-4, rtol=1e-4), (
        f"max abs err {jnp.max(jnp.abs(out2 - ref2))}"
    )

    # Case 3: bf16 activations (weights auto-cast -> bf16 MXU path), loose tol.
    x3 = x2.astype(jnp.bfloat16)
    out3 = jax.block_until_ready(classification_head(x3, w1, b1, w2, b2, w3, b3))
    assert out3.shape == (B2, 4), out3.shape
    assert out3.dtype == jnp.float32
    assert jnp.allclose(out3, ref2, atol=5e-2, rtol=5e-2), (
        f"max abs err {jnp.max(jnp.abs(out3 - ref2))}"
    )

    print("KERNEL_OK")
</pallas_src>

<mosaic_0001>
module attributes {stable_mosaic.version = 11 : i64} {
  func.func @_head_kernel(%arg0: i32, %arg1: memref<2x256xf32, #tpu.memory_space<vmem>>, %arg2: memref<256x64xf32, #tpu.memory_space<vmem>>, %arg3: memref<1x64xf32, #tpu.memory_space<vmem>>, %arg4: memref<64x8xf32, #tpu.memory_space<vmem>>, %arg5: memref<1x8xf32, #tpu.memory_space<vmem>>, %arg6: memref<8x4xf32, #tpu.memory_space<vmem>>, %arg7: memref<1x4xf32, #tpu.memory_space<vmem>>, %arg8: memref<2x4xf32, #tpu.memory_space<vmem>>) attributes {dimension_semantics = [#tpu.dimension_semantics<parallel>], iteration_bounds = array<i64: 1>, scalar_prefetch = 0 : i64, scratch_operands = 0 : i64, tpu.core_type = #tpu.core_type<tc>, window_params = [{transform_indices = @transform_0, window_bounds = array<i64: 2, 256>}, {pipeline_mode = #tpu.pipeline_mode<synchronous>, transform_indices = @transform_1, window_bounds = array<i64: 256, 64>}, {pipeline_mode = #tpu.pipeline_mode<synchronous>, transform_indices = @transform_2, window_bounds = array<i64: 1, 64>}, {pipeline_mode = #tpu.pipeline_mode<synchronous>, transform_indices = @transform_3, window_bounds = array<i64: 64, 8>}, {pipeline_mode = #tpu.pipeline_mode<synchronous>, transform_indices = @transform_4, window_bounds = array<i64: 1, 8>}, {pipeline_mode = #tpu.pipeline_mode<synchronous>, transform_indices = @transform_5, window_bounds = array<i64: 8, 4>}, {pipeline_mode = #tpu.pipeline_mode<synchronous>, transform_indices = @transform_6, window_bounds = array<i64: 1, 4>}, {transform_indices = @transform_7, window_bounds = array<i64: 2, 4>}]} {
    %c0 = arith.constant 0 : index
    %c0_0 = arith.constant 0 : index
    %0 = vector.load %arg1[%c0, %c0_0] : memref<2x256xf32, #tpu.memory_space<vmem>>, vector<2x256xf32>
    %c0_1 = arith.constant 0 : index
    %c0_2 = arith.constant 0 : index
    %1 = vector.load %arg2[%c0_1, %c0_2] : memref<256x64xf32, #tpu.memory_space<vmem>>, vector<256x64xf32>
    %cst = arith.constant dense<0.000000e+00> : vector<2x64xf32>
    %2 = tpu.matmul %0, %1, %cst {dimension_numbers = #tpu.dot_dimension_numbers<[1], [0], [0], [1], [0, 0, 1, 1], [], []>} : vector<2x256xf32>, vector<256x64xf32>, vector<2x64xf32> -> vector<2x64xf32>
    %c0_3 = arith.constant 0 : index
    %c0_4 = arith.constant 0 : index
    %3 = vector.load %arg3[%c0_3, %c0_4] : memref<1x64xf32, #tpu.memory_space<vmem>>, vector<1x64xf32>
    %4 = vector.broadcast %3 : vector<1x64xf32> to vector<2x64xf32>
    %5 = arith.addf %2, %4 : vector<2x64xf32>
    %cst_5 = arith.constant 5.000000e-01 : f32
    %6 = vector.broadcast %cst_5 : f32 to vector<2x64xf32>
    %7 = arith.mulf %6, %5 : vector<2x64xf32>
    %cst_6 = arith.constant 0.707106769 : f32
    %8 = vector.broadcast %cst_6 : f32 to vector<2x64xf32>
    %9 = arith.mulf %5, %8 : vector<2x64xf32>
    %10 = math.erf %9 : vector<2x64xf32>
    %cst_7 = arith.constant 1.000000e+00 : f32
    %11 = vector.broadcast %cst_7 : f32 to vector<2x64xf32>
    %12 = arith.addf %11, %10 : vector<2x64xf32>
    %13 = arith.mulf %7, %12 : vector<2x64xf32>
    %c0_8 = arith.constant 0 : index
    %c0_9 = arith.constant 0 : index
    %14 = vector.load %arg4[%c0_8, %c0_9] : memref<64x8xf32, #tpu.memory_space<vmem>>, vector<64x8xf32>
    %cst_10 = arith.constant dense<0.000000e+00> : vector<2x8xf32>
    %15 = tpu.matmul %13, %14, %cst_10 {dimension_numbers = #tpu.dot_dimension_numbers<[1], [0], [0], [1], [0, 0, 1, 1], [], []>} : vector<2x64xf32>, vector<64x8xf32>, vector<2x8xf32> -> vector<2x8xf32>
    %c0_11 = arith.constant 0 : index
    %c0_12 = arith.constant 0 : index
    %16 = vector.load %arg5[%c0_11, %c0_12] : memref<1x8xf32, #tpu.memory_space<vmem>>, vector<1x8xf32>
    %17 = vector.broadcast %16 : vector<1x8xf32> to vector<2x8xf32>
    %18 = arith.addf %15, %17 : vector<2x8xf32>
    %cst_13 = arith.constant 5.000000e-01 : f32
    %19 = vector.broadcast %cst_13 : f32 to vector<2x8xf32>
    %20 = arith.mulf %19, %18 : vector<2x8xf32>
    %cst_14 = arith.constant 0.707106769 : f32
    %21 = vector.broadcast %cst_14 : f32 to vector<2x8xf32>
    %22 = arith.mulf %18, %21 : vector<2x8xf32>
    %23 = math.erf %22 : vector<2x8xf32>
    %cst_15 = arith.constant 1.000000e+00 : f32
    %24 = vector.broadcast %cst_15 : f32 to vector<2x8xf32>
    %25 = arith.addf %24, %23 : vector<2x8xf32>
    %26 = arith.mulf %20, %25 : vector<2x8xf32>
    %c0_16 = arith.constant 0 : index
    %c0_17 = arith.constant 0 : index
    %27 = vector.load %arg6[%c0_16, %c0_17] : memref<8x4xf32, #tpu.memory_space<vmem>>, vector<8x4xf32>
    %cst_18 = arith.constant dense<0.000000e+00> : vector<2x4xf32>
    %28 = tpu.matmul %26, %27, %cst_18 {dimension_numbers = #tpu.dot_dimension_numbers<[1], [0], [0], [1], [0, 0, 1, 1], [], []>} : vector<2x8xf32>, vector<8x4xf32>, vector<2x4xf32> -> vector<2x4xf32>
    %c0_19 = arith.constant 0 : index
    %c0_20 = arith.constant 0 : index
    %29 = vector.load %arg7[%c0_19, %c0_20] : memref<1x4xf32, #tpu.memory_space<vmem>>, vector<1x4xf32>
    %30 = vector.broadcast %29 : vector<1x4xf32> to vector<2x4xf32>
    %31 = arith.addf %28, %30 : vector<2x4xf32>
    %c0_21 = arith.constant 0 : index
    %c0_22 = arith.constant 0 : index
    %32 = vector.load %arg8[%c0_21, %c0_22] : memref<2x4xf32, #tpu.memory_space<vmem>>, vector<2x4xf32>
    tpu.vector_store %arg8[%c0_21, %c0_22], %31 {strides = array<i32>} : memref<2x4xf32, #tpu.memory_space<vmem>>, vector<2x4xf32>,
    return
  }
  func.func @transform_0(%arg0: i32) -> (i32, i32) {
    %c0_i32 = arith.constant 0 : i32
    %c0_i32_0 = arith.constant 0 : i32
    return %arg0, %c0_i32 : i32, i32
  }
  func.func @transform_1(%arg0: i32) -> (i32, i32) {
    %c0_i32 = arith.constant 0 : i32
    %c0_i32_0 = arith.constant 0 : i32
    %c0_i32_1 = arith.constant 0 : i32
    return %c0_i32, %c0_i32_0 : i32, i32
  }
  func.func @transform_2(%arg0: i32) -> (i32, i32) {
    %c0_i32 = arith.constant 0 : i32
    %c0_i32_0 = arith.constant 0 : i32
    %c0_i32_1 = arith.constant 0 : i32
    return %c0_i32, %c0_i32_0 : i32, i32
  }
  func.func @transform_3(%arg0: i32) -> (i32, i32) {
    %c0_i32 = arith.constant 0 : i32
    %c0_i32_0 = arith.constant 0 : i32
    %c0_i32_1 = arith.constant 0 : i32
    return %c0_i32, %c0_i32_0 : i32, i32
  }
  func.func @transform_4(%arg0: i32) -> (i32, i32) {
    %c0_i32 = arith.constant 0 : i32
    %c0_i32_0 = arith.constant 0 : i32
    %c0_i32_1 = arith.constant 0 : i32
    return %c0_i32, %c0_i32_0 : i32, i32
  }
  func.func @transform_5(%arg0: i32) -> (i32, i32) {
    %c0_i32 = arith.constant 0 : i32
    %c0_i32_0 = arith.constant 0 : i32
    %c0_i32_1 = arith.constant 0 : i32
    return %c0_i32, %c0_i32_0 : i32, i32
  }
  func.func @transform_6(%arg0: i32) -> (i32, i32) {
    %c0_i32 = arith.constant 0 : i32
    %c0_i32_0 = arith.constant 0 : i32
    %c0_i32_1 = arith.constant 0 : i32
    return %c0_i32, %c0_i32_0 : i32, i32
  }
  func.func @transform_7(%arg0: i32) -> (i32, i32) {
    %c0_i32 = arith.constant 0 : i32
    %c0_i32_0 = arith.constant 0 : i32
    return %arg0, %c0_i32 : i32, i32
  }
}

</mosaic_0001>

<llo_original>
// kernel: classification_head.1
$region0: #{classification_head.1}
  #allocation0 [shape = 'u32[]', space=smem, size = 0x4, offset = 0x4, fixed_abs, tag = 'smem constant byte address 0x4 - core index']
  #allocation1 [shape = 'u32[72,128]{1,0:T(1,128)}', space=vmem, size = 0x9000, scoped, tag = 'internal scratch']
  %s0 = inlined_call_operand.vmem [shape: f32[2,256], index: 0, kind: input, shape index: {}]
  %s1 = inlined_call_operand.vmem [shape: f32[256,64], index: 1, kind: input, shape index: {}]
  %s2 = inlined_call_operand.vmem [shape: f32[1,64], index: 2, kind: input, shape index: {}]
  %s3 = inlined_call_operand.vmem [shape: f32[64,8], index: 3, kind: input, shape index: {}]
  %s4 = inlined_call_operand.vmem [shape: f32[1,8], index: 4, kind: input, shape index: {}]
  %s5 = inlined_call_operand.vmem [shape: f32[8,4], index: 5, kind: input, shape index: {}]
  %s6 = inlined_call_operand.vmem [shape: f32[1,4], index: 6, kind: input, shape index: {}]
  %s7 = inlined_call_operand.hbm [shape: f32[2,4], index: 7, kind: output, shape index: {}]
  %s8 = sld [smem:[#allocation0]]
  $region38: #{classification_head.1} parent=0
    _
  %s10 = ssub.s32 1, %s8
  %s11 = scalar_select 0, %s10, %s8
  $region1: #{classification_head.1} parent=0
    #allocation2 [shape = 'u8[1024]{0}', space=vmem, size = 0x400, scoped, tag = 'output window, operand 0, single buffered']
    #allocation3 [shape = 's32[1]{0}', space=sflag, size = 0x4, scoped, tag = 'scoped memory for classification_head.1']
    %12 = vsyncpa [#allocation3], 0
    // Predicated region
    $region2: #{classification_head.1} parent=1 // pred_check
      _
    $region3: #{classification_head.1} parent=1 // pred_check_branch
      %14 = sbr.rel (0) target = $region5
    $region4: #{classification_head.1} parent=1 // pred_region
      _
    $region5: #{classification_head.1} parent=1 // pred_fallthru
      _
    // Predicated region
    $region6: #{classification_head.1} parent=1 // pred_check
      _
    $region7: #{classification_head.1} parent=1 // pred_check_branch
      %16 = sbr.rel (0) target = $region9
    $region8: #{classification_head.1} parent=1 // pred_region
      _
    $region9: #{classification_head.1} parent=1 // pred_fallthru
      _
    // Predicated region
    $region10: #{classification_head.1} parent=1 // pred_check
      _
    $region11: #{classification_head.1} parent=1 // pred_check_branch
      %18 = sbr.rel (0) target = $region13
    $region12: #{classification_head.1} parent=1 // pred_region
      _
    $region13: #{classification_head.1} parent=1 // pred_fallthru
      _
    // Predicated region
    $region14: #{classification_head.1} parent=1 // pred_check
      _
    $region15: #{classification_head.1} parent=1 // pred_check_branch
      %20 = sbr.rel (0) target = $region17
    $region16: #{classification_head.1} parent=1 // pred_region
      _
    $region17: #{classification_head.1} parent=1 // pred_fallthru
      _
    // Predicated region
    $region18: #{classification_head.1} parent=1 // pred_check
      _
    $region19: #{classification_head.1} parent=1 // pred_check_branch
      %22 = sbr.rel (0) target = $region21
    $region20: #{classification_head.1} parent=1 // pred_region
      _
    $region21: #{classification_head.1} parent=1 // pred_fallthru
      _
    // Predicated region
    $region22: #{classification_head.1} parent=1 // pred_check
      _
    $region23: #{classification_head.1} parent=1 // pred_check_branch
      %24 = sbr.rel (0) target = $region25
    $region24: #{classification_head.1} parent=1 // pred_region
      _
    $region25: #{classification_head.1} parent=1 // pred_fallthru
      _
    // Predicated region
    $region26: #{classification_head.1} parent=1 // pred_check
      _
    $region27: #{classification_head.1} parent=1 // pred_check_branch
      %26 = sbr.rel (0) target = $region29
    $region28: #{classification_head.1} parent=1 // pred_region
      _
    $region29: #{classification_head.1} parent=1 // pred_fallthru
      _
    %v27 = vld [vmem:[%s0] sm:$0xf]
    %v28 = vld [vmem:[%s1] sm:$0xff]
    %v29 = vld [vmem:[%s1 + $0x8] sm:$0xff]
    %v30 = vld [vmem:[%s1 + $0x10] sm:$0xff]
    %v31 = vld [vmem:[%s1 + $0x18] sm:$0xff]
    %v32 = vld [vmem:[%s1 + $0x20] sm:$0xff]
    %v33 = vld [vmem:[%s1 + $0x28] sm:$0xff]
    %v34 = vld [vmem:[%s1 + $0x30] sm:$0xff]
    %v35 = vld [vmem:[%s1 + $0x38] sm:$0xff]
    %v36 = vld [vmem:[%s1 + $0x40] sm:$0xff]
    %v37 = vld [vmem:[%s1 + $0x48] sm:$0xff]
    %v38 = vld [vmem:[%s1 + $0x50] sm:$0xff]
    %v39 = vld [vmem:[%s1 + $0x58] sm:$0xff]
    %v40 = vld [vmem:[%s1 + $0x60] sm:$0xff]
    %v41 = vld [vmem:[%s1 + $0x68] sm:$0xff]
    %v42 = vld [vmem:[%s1 + $0x70] sm:$0xff]
    %v43 = vld [vmem:[%s1 + $0x78] sm:$0xff]
    %v44 = vld [vmem:[%s1 + $0x80] sm:$0xff]
    %v45 = vld [vmem:[%s1 + $0x88] sm:$0xff]
    %v46 = vld [vmem:[%s1 + $0x90] sm:$0xff]
    %v47 = vld [vmem:[%s1 + $0x98] sm:$0xff]
    %v48 = vld [vmem:[%s1 + $0xa0] sm:$0xff]
    %v49 = vld [vmem:[%s1 + $0xa8] sm:$0xff]
    %v50 = vld [vmem:[%s1 + $0xb0] sm:$0xff]
    %v51 = vld [vmem:[%s1 + $0xb8] sm:$0xff]
    %v52 = vld [vmem:[%s1 + $0xc0] sm:$0xff]
    %v53 = vld [vmem:[%s1 + $0xc8] sm:$0xff]
    %v54 = vld [vmem:[%s1 + $0xd0] sm:$0xff]
    %v55 = vld [vmem:[%s1 + $0xd8] sm:$0xff]
    %v56 = vld [vmem:[%s1 + $0xe0] sm:$0xff]
    %v57 = vld [vmem:[%s1 + $0xe8] sm:$0xff]
    %v58 = vld [vmem:[%s1 + $0xf0] sm:$0xff]
    %v59 = vld [vmem:[%s1 + $0xf8] sm:$0xff]
    %v60 = vld [vmem:[%s2] sm:$0x1]
    %v62 = vperm.slane %v60, 0
    %65 = vst [vmem:[#allocation1] ss:$4 sm:$0xff] %v27
    %v66 = vld.sshfl [vmem:[#allocation1] sm:$0xff pattern:$0x73625140]
    %v67 = vld.sshfl [vmem:[#allocation1 + $0x8] sm:$0xff pattern:$0x73625140]
    %70 = vmatpush.msra.mxu0 %v43
    %71 = vmatpush.msra.mxu0 %v42
    %72 = vmatpush.msra.mxu0 %v41
    %73 = vmatpush.msra.mxu0 %v40
    %74 = vmatpush.msra.mxu0 %v39
    %75 = vmatpush.msra.mxu0 %v38
    %76 = vmatpush.msra.mxu0 %v37
    %77 = vmatpush.msra.mxu0 %v36
    %78 = vmatpush.msra.mxu0 %v35
    %79 = vmatpush.msra.mxu0 %v34
    %80 = vmatpush.msra.mxu0 %v33
    %81 = vmatpush.msra.mxu0 %v32
    %82 = vmatpush.msra.mxu0 %v31
    %83 = vmatpush.msra.mxu0 %v30
    %84 = vmatpush.msra.mxu0 %v29
    %85 = vmatpush.msra.mxu0 %v28
    %86 = vmatmul.f32.gmra.mxu0 %v66
    %v87 = vpop.f32.mrf.mxu0
    %v88 = vadd.f32 %v62, %v87
    %89 = vdwg.mxu0
    %90 = vmatpush.msra.mxu0 %v59
    %91 = vmatpush.msra.mxu0 %v58
    %92 = vmatpush.msra.mxu0 %v57
    %93 = vmatpush.msra.mxu0 %v56
    %94 = vmatpush.msra.mxu0 %v55
    %95 = vmatpush.msra.mxu0 %v54
    %96 = vmatpush.msra.mxu0 %v53
    %97 = vmatpush.msra.mxu0 %v52
    %98 = vmatpush.msra.mxu0 %v51
    %99 = vmatpush.msra.mxu0 %v50
    %100 = vmatpush.msra.mxu0 %v49
    %101 = vmatpush.msra.mxu0 %v48
    %102 = vmatpush.msra.mxu0 %v47
    %103 = vmatpush.msra.mxu0 %v46
    %104 = vmatpush.msra.mxu0 %v45
    %105 = vmatpush.msra.mxu0 %v44
    %106 = vmatmul.f32.gmra.mxu0 %v67
    %v107 = vpop.f32.mrf.mxu0
    %v108 = vadd.f32 %v88, %v107
    %109 = vdwg.mxu0
    %v110 = vmul.f32 %v108, 0.5
    %v111 = vmul.f32 %v108, 0.70710677
    %v112 = vmul.f32 %v111, %v111
    %v113 = vmin.f32 16.0, %v112
    %v114 = vmul.f32 %v113, 2.1237322e-06
    %v115 = vadd.f32 %v114, 0.00028619796
    %v116 = vmul.f32 %v113, %v115
    %v117 = vadd.f32 %v116, 0.0036580483
    %v118 = vmul.f32 %v113, %v117
    %v119 = vadd.f32 %v118, 0.05243302
    %v120 = vmul.f32 %v113, %v119
    %v121 = vadd.f32 %v120, 0.18741608
    %v122 = vmul.f32 %v113, %v121
    %v123 = vadd.f32 %v122, 1.1283791
    %v124 = vmul.f32 %v111, %v123
    %v125 = vmul.f32 %v113, 3.8918573e-05
    %v126 = vadd.f32 %v125, 0.001143296
    %v127 = vmul.f32 %v113, %v126
    %v128 = vadd.f32 %v127, 0.014752088
    %v129 = vmul.f32 %v113, %v128
    %v130 = vadd.f32 %v129, 0.112945676
    %v131 = vmul.f32 %v113, %v130
    %v132 = vadd.f32 %v131, 0.4994258
    %v133 = vmul.f32 %v113, %v132
    %v134 = vadd.f32 %v133, 1.0
    %v135 = vrcp.pop %v134
    %v136 = vmul.f32 %v134, %v135
    %v137 = vsub.f32 1.0, %v136
    %v138 = vmul.f32 %v135, %v137
    %v139 = vadd.f32 %v135, %v138
    %vm140 = vweird.f32 %v134
    %vm141 = vweird.f32 %v135
    %vm142 = vmor %vm140, %vm141
    %v143 = vsel %vm142, %v135, %v139
    %v144 = vand.u32 2147483647, %v134
    %vm145 = vcmp.eq.f32.partialorder %v144, 8.507059e+37
    %v146 = vand.u32 %v134, 2147483648
    %v147 = vor.u32 1.1754944e-38, %v146
    %v148 = vsel %vm145, %v147, %v143
    %v149 = vmul.f32 %v124, %v148
    %v150 = vmin.f32 %v149, 1.0
    %v151 = vmax.f32 %v150, -1.0
    %v152 = vadd.f32 %v151, 1.0
    %v153 = vmul.f32 %v110, %v152
    %v154 = vld [vmem:[%s3] sm:$0xff]
    %v155 = vld [vmem:[%s3 + $0x8] sm:$0xff]
    %v156 = vld [vmem:[%s3 + $0x10] sm:$0xff]
    %v157 = vld [vmem:[%s3 + $0x18] sm:$0xff]
    %v158 = vld [vmem:[%s3 + $0x20] sm:$0xff]
    %v159 = vld [vmem:[%s3 + $0x28] sm:$0xff]
    %v160 = vld [vmem:[%s3 + $0x30] sm:$0xff]
    %v161 = vld [vmem:[%s3 + $0x38] sm:$0xff]
    %v162 = vld [vmem:[%s4] sm:$0x1]
    %v164 = vperm.slane %v162, 0
    %vm166 = vcmask 523264
    %v168 = vsel %vm166, %v153, 0
    %170 = vmatpush.msra.mxu0 0.0
    %171 = vmatpush.msra.mxu0 0.0
    %172 = vmatpush.msra.mxu0 0.0
    %173 = vmatpush.msra.mxu0 0.0
    %174 = vmatpush.msra.mxu0 0.0
    %175 = vmatpush.msra.mxu0 0.0
    %176 = vmatpush.msra.mxu0 0.0
    %177 = vmatpush.msra.mxu0 0.0
    %178 = vmatpush.msra.mxu0 %v161
    %179 = vmatpush.msra.mxu0 %v160
    %180 = vmatpush.msra.mxu0 %v159
    %181 = vmatpush.msra.mxu0 %v158
    %182 = vmatpush.msra.mxu0 %v157
    %183 = vmatpush.msra.mxu0 %v156
    %184 = vmatpush.msra.mxu0 %v155
    %185 = vmatpush.msra.mxu0 %v154
    %186 = vmatmul.f32.gmra.mxu0 %v168
    %v187 = vpop.f32.mrf.mxu0
    %v188 = vadd.f32 %v164, %v187
    %189 = vdwg.mxu0
    %v190 = vmul.f32 %v188, 0.5
    %v191 = vmul.f32 %v188, 0.70710677
    %v192 = vmul.f32 %v191, %v191
    %v193 = vmin.f32 16.0, %v192
    %v194 = vmul.f32 %v193, 2.1237322e-06
    %v195 = vadd.f32 %v194, 0.00028619796
    %v196 = vmul.f32 %v193, %v195
    %v197 = vadd.f32 %v196, 0.0036580483
    %v198 = vmul.f32 %v193, %v197
    %v199 = vadd.f32 %v198, 0.05243302
    %v200 = vmul.f32 %v193, %v199
    %v201 = vadd.f32 %v200, 0.18741608
    %v202 = vmul.f32 %v193, %v201
    %v203 = vadd.f32 %v202, 1.1283791
    %v204 = vmul.f32 %v191, %v203
    %v205 = vmul.f32 %v193, 3.8918573e-05
    %v206 = vadd.f32 %v205, 0.001143296
    %v207 = vmul.f32 %v193, %v206
    %v208 = vadd.f32 %v207, 0.014752088
    %v209 = vmul.f32 %v193, %v208
    %v210 = vadd.f32 %v209, 0.112945676
    %v211 = vmul.f32 %v193, %v210
    %v212 = vadd.f32 %v211, 0.4994258
    %v213 = vmul.f32 %v193, %v212
    %v214 = vadd.f32 %v213, 1.0
    %v215 = vrcp.pop %v214
    %v216 = vmul.f32 %v214, %v215
    %v217 = vsub.f32 1.0, %v216
    %v218 = vmul.f32 %v215, %v217
    %v219 = vadd.f32 %v215, %v218
    %vm220 = vweird.f32 %v214
    %vm221 = vweird.f32 %v215
    %vm222 = vmor %vm220, %vm221
    %v223 = vsel %vm222, %v215, %v219
    %v224 = vand.u32 2147483647, %v214
    %vm225 = vcmp.eq.f32.partialorder %v224, 8.507059e+37
    %v226 = vand.u32 %v214, 2147483648
    %v227 = vor.u32 1.1754944e-38, %v226
    %v228 = vsel %vm225, %v227, %v223
    %v229 = vmul.f32 %v204, %v228
    %v230 = vmin.f32 %v229, 1.0
    %v231 = vmax.f32 %v230, -1.0
    %v232 = vadd.f32 %v231, 1.0
    %v233 = vmul.f32 %v190, %v232
    %v234 = vld [vmem:[%s5] sm:$0xff]
    %v235 = vld [vmem:[%s6] sm:$0x1]
    %v237 = vperm.slane %v235, 0
    %vm239 = vcmask 64512
    %v241 = vsel %vm239, %v233, 0
    %243 = vmatpush.msra.mxu0 0.0
    %244 = vmatpush.msra.mxu0 0.0
    %245 = vmatpush.msra.mxu0 0.0
    %246 = vmatpush.msra.mxu0 0.0
    %247 = vmatpush.msra.mxu0 0.0
    %248 = vmatpush.msra.mxu0 0.0
    %249 = vmatpush.msra.mxu0 0.0
    %250 = vmatpush.msra.mxu0 0.0
    %251 = vmatpush.msra.mxu0 0.0
    %252 = vmatpush.msra.mxu0 0.0
    %253 = vmatpush.msra.mxu0 0.0
    %254 = vmatpush.msra.mxu0 0.0
    %255 = vmatpush.msra.mxu0 0.0
    %256 = vmatpush.msra.mxu0 0.0
    %257 = vmatpush.msra.mxu0 0.0
    %258 = vmatpush.msra.mxu0 %v234
    %259 = vmatmul.f32.gmra.mxu0 %v241
    %v260 = vpop.f32.mrf.mxu0
    %v261 = vadd.f32 %v237, %v260
    %262 = vdwg.mxu0
    %vm263 = vcmask 25600
    %264 = vst.msk [vmem:[#allocation2] sm:$0x3] %vm263, %v261
    // Predicated region
    $region30: #{classification_head.1} parent=1 // pred_check
      _
    $region31: #{classification_head.1} parent=1 // pred_check_branch
      %266 = sbr.rel (0) target = $region33
    $region32: #{classification_head.1} parent=1 // pred_region
      %268 = vsyncadd [#allocation3], 0
      %s270 = sshll.u32 [#allocation2], 4
      %s271 = int_to_ptr.vmem [resolvable:$true] %s270
      %s272 = sshll.u32 %s7, 4
      %s273 = int_to_ptr.hbm [resolvable:$true] %s272
      %275 = dma.vmem_to_hbm [thread:$0]  %s271, 32, %s273, [#allocation3]
    $region33: #{classification_head.1} parent=1 // pred_fallthru
      _
    // Predicated region
    $region34: #{classification_head.1} parent=1 // pred_check
      _
    $region35: #{classification_head.1} parent=1 // pred_check_branch
      %277 = sbr.rel (0) target = $region37
    $region36: #{classification_head.1} parent=1 // pred_region
      %279 = dma.done [#allocation3], 32
    $region37: #{classification_head.1} parent=1 // pred_fallthru
      _
    %280 = vsyncpa [#allocation3], 1

</llo_original>
